<compile_context>
chip_gen: v6e
topology: v6e:2x2x1
jax: 0.10.0
libtpu: 0.0.40
codegen_flags: <defaults>
</compile_context>

<pallas_src>
import functools

import jax
import jax.numpy as jnp
from jax import lax
from jax.experimental import pallas as pl
from jax.experimental.pallas import tpu as pltpu


# ---------------------------------------------------------------------------
# Kernels
# ---------------------------------------------------------------------------

def _atten_out_kernel(x_ref, w_ref, out_ref, *, num_heads, head_dim):
    """ra == 0 path: out = softmax(q k^T * scale) @ v  (scale folded into W_q).

    x_ref:   (TB, N, C)  f32  node features for TB batch elements
    w_ref:   (C, 3C)     bf16 fused qkv projection (columns: q | k | v)
    out_ref: (TB, N, C)        attended features
    """
    TB, N, C = x_ref.shape
    H, hd = num_heads, head_dim

    # One wide bf16 MXU matmul for all TB*N rows and all of q|k|v (f32 acc).
    x = x_ref[...].astype(jnp.bfloat16).reshape(TB * N, C)
    qkv = jnp.dot(x, w_ref[...], preferred_element_type=jnp.float32)  # (TB*N, 3C)

    for b in range(TB):                      # static unroll: TB is small
        rows = qkv[b * N:(b + 1) * N]        # (N, 3C), static slice
        for h in range(H):                   # static unroll: H is small
            lo = h * hd
            q = rows[:, lo:lo + hd]                       # scale already in W_q
            k = rows[:, C + lo:C + lo + hd]
            v = rows[:, 2 * C + lo:2 * C + lo + hd]

            # q @ k^T on the MXU (bf16 operands, f32 accumulate), no k.T copy.
            s = lax.dot_general(q.astype(jnp.bfloat16), k.astype(jnp.bfloat16),
                                (((1,), (1,)), ((), ())),
                                preferred_element_type=jnp.float32)   # (N, N)
            s = s - jnp.max(s, axis=-1, keepdims=True)
            p = jnp.exp(s)
            p = p * pl.reciprocal(jnp.sum(p, axis=-1, keepdims=True), approx=True)

            o = jnp.dot(p.astype(jnp.bfloat16), v.astype(jnp.bfloat16),
                        preferred_element_type=jnp.float32)           # (N, hd)
            # Direct per-head column store (no lane-axis concatenate).
            out_ref[b, :, lo:lo + hd] = o.astype(out_ref.dtype)


def _atten_map_kernel(x_ref, w_ref, attn_ref, *, num_heads, head_dim):
    """ra == 1 path: write only the softmaxed attention map (no v / p@v work).

    x_ref:    (TB, N, C)     f32  node features
    w_ref:    (C, 2C)        bf16 fused q|k projection (v columns dropped)
    attn_ref: (TB, H, N, N)       attention map
    """
    TB, N, C = x_ref.shape
    H, hd = num_heads, head_dim

    x = x_ref[...].astype(jnp.bfloat16).reshape(TB * N, C)
    qk = jnp.dot(x, w_ref[...], preferred_element_type=jnp.float32)   # (TB*N, 2C)

    for b in range(TB):
        rows = qk[b * N:(b + 1) * N]
        for h in range(H):
            lo = h * hd
            q = rows[:, lo:lo + hd]
            k = rows[:, C + lo:C + lo + hd]

            s = lax.dot_general(q.astype(jnp.bfloat16), k.astype(jnp.bfloat16),
                                (((1,), (1,)), ((), ())),
                                preferred_element_type=jnp.float32)
            s = s - jnp.max(s, axis=-1, keepdims=True)
            p = jnp.exp(s)
            # User-visible map: exact normalization so rows sum to 1.
            p = p / jnp.sum(p, axis=-1, keepdims=True)

            attn_ref[b, h] = p.astype(attn_ref.dtype)


# ---------------------------------------------------------------------------
# Host-side wrappers
# ---------------------------------------------------------------------------

def fuse_qkv_weight(w_qkv, num_heads=1, dtype=jnp.bfloat16):
    """One-time host-side transform of the nn.Linear(dim, 3*dim, bias=False)
    weight (3C, C) into the kernel layout:
      * transpose to (C, 3C) so the kernel does x @ W in one MXU pass,
      * fold the softmax scale (head_dim ** -0.5) into the q columns,
      * cast to bf16 (native MXU operand dtype; accumulation stays f32).
    Columns are ordered [q | k | v], each head-major (same as PyTorch).
    Call once outside the hot path / jit."""
    w = jnp.asarray(w_qkv, jnp.float32)
    C = w.shape[1]
    scale = float(C // num_heads) ** (-0.5)
    w = w.T                                   # (C, 3C)
    w = w.at[:, :C].multiply(scale)           # scale only the q columns
    return w.astype(dtype)


def _pick_block_b(B, N):
    """Batch elements per grid step: aim for TB*N >= 128 (healthy MXU M),
    but keep >= 2 grid steps when possible so both v7x TensorCores get work."""
    tb = max(1, min(B, pl.cdiv(128, N)))
    while B % tb:
        tb -= 1
    if B // tb < 2 and B >= 2:
        tb = max(1, B // 2)
        while B % tb:
            tb -= 1
    return tb


def atten_forward(node_feat, w_fused, num_heads=1, ra=0):
    """Pallas equivalent of Atten.forward.

    node_feat: (B, N, C) float32
    w_fused:   (C, 3C)   bf16 (from fuse_qkv_weight; scale folded into q cols)
    Returns (B, N, C) if ra == 0, else the attention map (B, H, N, N).
    """
    B, N, C = node_feat.shape
    H = num_heads
    hd = C // H
    TB = _pick_block_b(B, N)
    grid = (B // TB,)

    compiler_params = pltpu.CompilerParams(
        dimension_semantics=("parallel",),        # batch axis -> megacore
        vmem_limit_bytes=48 * 1024 * 1024,
    )

    if ra == 1:
        w_qk = w_fused[:, :2 * C]                 # only q and k are needed
        kernel = functools.partial(
            _atten_map_kernel, num_heads=H, head_dim=hd)
        return pl.pallas_call(
            kernel,
            out_shape=jax.ShapeDtypeStruct((B, H, N, N), jnp.float32),
            grid_spec=pltpu.PrefetchScalarGridSpec(
                num_scalar_prefetch=0,
                grid=grid,
                in_specs=[
                    pl.BlockSpec((TB, N, C), lambda i: (i, 0, 0)),
                    pl.BlockSpec((C, 2 * C), lambda i: (0, 0)),
                ],
                out_specs=pl.BlockSpec((TB, H, N, N), lambda i: (i, 0, 0, 0)),
            ),
            compiler_params=compiler_params,
        )(node_feat, w_qk)

    kernel = functools.partial(
        _atten_out_kernel, num_heads=H, head_dim=hd)
    return pl.pallas_call(
        kernel,
        out_shape=jax.ShapeDtypeStruct((B, N, C), node_feat.dtype),
        grid_spec=pltpu.PrefetchScalarGridSpec(
            num_scalar_prefetch=0,
            grid=grid,
            in_specs=[
                pl.BlockSpec((TB, N, C), lambda i: (i, 0, 0)),
                pl.BlockSpec((C, 3 * C), lambda i: (0, 0)),
            ],
            out_specs=pl.BlockSpec((TB, N, C), lambda i: (i, 0, 0)),
        ),
        compiler_params=compiler_params,
    )(node_feat, w_fused)


# ---------------------------------------------------------------------------
# Pure-JAX reference (mirrors the PyTorch module, f32 throughout)
# ---------------------------------------------------------------------------

def _reference(node_feat, w_qkv, num_heads=1, ra=0):
    B, N, C = node_feat.shape
    H = num_heads
    hd = C // H
    scale = float(hd) ** (-0.5)
    qkv = node_feat @ w_qkv.T                                  # (B, N, 3C)
    qkv = qkv.reshape(B, N, 3, H, hd).transpose(2, 0, 3, 1, 4)
    q, k, v = qkv[0], qkv[1], qkv[2]                           # (B, H, N, hd)
    attn = jnp.einsum("bhnd,bhmd->bhnm", q, k) * scale
    attn = jax.nn.softmax(attn, axis=-1)
    if ra == 1:
        return attn
    x = jnp.einsum("bhnm,bhmd->bhnd", attn, v)
    return jnp.transpose(x, (0, 2, 1, 3)).reshape(B, N, C)


# ---------------------------------------------------------------------------
# Self-test
# ---------------------------------------------------------------------------

if __name__ == "__main__":
    B, N, C = 4, 8, 32    # B=4 so the TB>1 per-step batching path is exercised

    key = jax.random.PRNGKey(0)
    k_x, k_w = jax.random.split(key)
    node_feat = jax.random.normal(k_x, (B, N, C), dtype=jnp.float32)
    # Deterministic init matching nn.Linear(dim, 3*dim, bias=False): (3C, C)
    w_qkv = jax.random.normal(k_w, (3 * C, C), dtype=jnp.float32) * (C ** -0.5)

    # bf16 MXU operands + EUP approx reciprocal => ~1e-2 level error vs the
    # pure-f32 reference, hence the loosened tolerance.
    TOL = dict(atol=5e-2, rtol=5e-2)

    for H in (1, 2):   # module default is 1; 2 exercises the per-head loop
        w_fused = fuse_qkv_weight(w_qkv, num_heads=H)   # one-time host fusion

        out = jax.block_until_ready(
            atten_forward(node_feat, w_fused, num_heads=H, ra=0))
        assert out.shape == (B, N, C)
        assert jnp.allclose(out, _reference(node_feat, w_qkv, H, 0), **TOL), \
            f"ra=0 mismatch for num_heads={H}"

        attn = jax.block_until_ready(
            atten_forward(node_feat, w_fused, num_heads=H, ra=1))
        assert attn.shape == (B, H, N, N)
        assert jnp.allclose(attn, _reference(node_feat, w_qkv, H, 1), **TOL), \
            f"ra=1 mismatch for num_heads={H}"

    print("KERNEL_OK")
</pallas_src>

<mosaic_0001>
module attributes {stable_mosaic.version = 11 : i64} {
  func.func @_atten_out_kernel(%arg0: i32, %arg1: memref<2x8x32xf32, #tpu.memory_space<vmem>>, %arg2: memref<32x96xbf16, #tpu.memory_space<vmem>>, %arg3: memref<2x8x32xf32, #tpu.memory_space<vmem>>) attributes {dimension_semantics = [#tpu.dimension_semantics<parallel>], iteration_bounds = array<i64: 2>, scalar_prefetch = 0 : i64, scratch_operands = 0 : i64, tpu.core_type = #tpu.core_type<tc>, window_params = [{transform_indices = @transform_0, window_bounds = array<i64: 2, 8, 32>}, {pipeline_mode = #tpu.pipeline_mode<synchronous>, transform_indices = @transform_1, window_bounds = array<i64: 32, 96>}, {transform_indices = @transform_2, window_bounds = array<i64: 2, 8, 32>}]} {
    %c0 = arith.constant 0 : index
    %c0_0 = arith.constant 0 : index
    %c0_1 = arith.constant 0 : index
    %0 = vector.load %arg1[%c0, %c0_0, %c0_1] : memref<2x8x32xf32, #tpu.memory_space<vmem>>, vector<2x8x32xf32>
    %1 = arith.truncf %0 : vector<2x8x32xf32> to vector<2x8x32xbf16>
    %2 = vector.shape_cast %1 : vector<2x8x32xbf16> to vector<16x32xbf16>
    %c0_2 = arith.constant 0 : index
    %c0_3 = arith.constant 0 : index
    %3 = vector.load %arg2[%c0_2, %c0_3] : memref<32x96xbf16, #tpu.memory_space<vmem>>, vector<32x96xbf16>
    %cst = arith.constant dense<0.000000e+00> : vector<16x96xf32>
    %4 = tpu.matmul %2, %3, %cst {dimension_numbers = #tpu.dot_dimension_numbers<[1], [0], [0], [1], [0, 0, 1, 1], [], []>} : vector<16x32xbf16>, vector<32x96xbf16>, vector<16x96xf32> -> vector<16x96xf32>
    %5 = vector.extract_strided_slice %4 {offsets = [0, 0], sizes = [8, 96], strides = [1, 1]} : vector<16x96xf32> to vector<8x96xf32>
    %6 = vector.extract_strided_slice %5 {offsets = [0, 0], sizes = [8, 32], strides = [1, 1]} : vector<8x96xf32> to vector<8x32xf32>
    %7 = vector.extract_strided_slice %5 {offsets = [0, 32], sizes = [8, 32], strides = [1, 1]} : vector<8x96xf32> to vector<8x32xf32>
    %8 = vector.extract_strided_slice %5 {offsets = [0, 64], sizes = [8, 32], strides = [1, 1]} : vector<8x96xf32> to vector<8x32xf32>
    %9 = arith.truncf %6 : vector<8x32xf32> to vector<8x32xbf16>
    %10 = arith.truncf %7 : vector<8x32xf32> to vector<8x32xbf16>
    %cst_4 = arith.constant dense<0.000000e+00> : vector<8x8xf32>
    %11 = tpu.matmul %9, %10, %cst_4 {dimension_numbers = #tpu.dot_dimension_numbers<[1], [1], [0], [0], [0, 0, 1, 0], [], []>} : vector<8x32xbf16>, vector<8x32xbf16>, vector<8x8xf32> -> vector<8x8xf32>
    %cst_5 = arith.constant dense<0xFF800000> : vector<8xf32>
    %12 = vector.multi_reduction <maximumf>, %11, %cst_5 [1] : vector<8x8xf32> to vector<8xf32>
    %13 = vector.shape_cast %12 : vector<8xf32> to vector<8x1xf32>
    %14 = vector.broadcast %13 : vector<8x1xf32> to vector<8x8xf32>
    %15 = arith.subf %11, %14 : vector<8x8xf32>
    %16 = math.exp %15 : vector<8x8xf32>
    %cst_6 = arith.constant dense<0.000000e+00> : vector<8xf32>
    %17 = vector.multi_reduction <add>, %16, %cst_6 [1] : vector<8x8xf32> to vector<8xf32>
    %18 = vector.shape_cast %17 : vector<8xf32> to vector<8x1xf32>
    %19 = tpu.reciprocal %18 {approx = true} : vector<8x1xf32> -> vector<8x1xf32>
    %20 = vector.broadcast %19 : vector<8x1xf32> to vector<8x8xf32>
    %21 = arith.mulf %16, %20 : vector<8x8xf32>
    %22 = arith.truncf %21 : vector<8x8xf32> to vector<8x8xbf16>
    %23 = arith.truncf %8 : vector<8x32xf32> to vector<8x32xbf16>
    %cst_7 = arith.constant dense<0.000000e+00> : vector<8x32xf32>
    %24 = tpu.matmul %22, %23, %cst_7 {dimension_numbers = #tpu.dot_dimension_numbers<[1], [0], [0], [1], [0, 0, 1, 1], [], []>} : vector<8x8xbf16>, vector<8x32xbf16>, vector<8x32xf32> -> vector<8x32xf32>
    %c0_8 = arith.constant 0 : index
    %c0_9 = arith.constant 0 : index
    %c0_10 = arith.constant 0 : index
    %25 = vector.load %arg3[%c0_8, %c0_9, %c0_10] : memref<2x8x32xf32, #tpu.memory_space<vmem>>, vector<1x8x32xf32>
    %26 = vector.shape_cast %25 : vector<1x8x32xf32> to vector<8x32xf32>
    %27 = vector.shape_cast %24 : vector<8x32xf32> to vector<1x8x32xf32>
    tpu.vector_store %arg3[%c0_8, %c0_9, %c0_10], %27 {strides = array<i32>} : memref<2x8x32xf32, #tpu.memory_space<vmem>>, vector<1x8x32xf32>,
    %28 = vector.extract_strided_slice %4 {offsets = [8, 0], sizes = [8, 96], strides = [1, 1]} : vector<16x96xf32> to vector<8x96xf32>
    %29 = vector.extract_strided_slice %28 {offsets = [0, 0], sizes = [8, 32], strides = [1, 1]} : vector<8x96xf32> to vector<8x32xf32>
    %30 = vector.extract_strided_slice %28 {offsets = [0, 32], sizes = [8, 32], strides = [1, 1]} : vector<8x96xf32> to vector<8x32xf32>
    %31 = vector.extract_strided_slice %28 {offsets = [0, 64], sizes = [8, 32], strides = [1, 1]} : vector<8x96xf32> to vector<8x32xf32>
    %32 = arith.truncf %29 : vector<8x32xf32> to vector<8x32xbf16>
    %33 = arith.truncf %30 : vector<8x32xf32> to vector<8x32xbf16>
    %cst_11 = arith.constant dense<0.000000e+00> : vector<8x8xf32>
    %34 = tpu.matmul %32, %33, %cst_11 {dimension_numbers = #tpu.dot_dimension_numbers<[1], [1], [0], [0], [0, 0, 1, 0], [], []>} : vector<8x32xbf16>, vector<8x32xbf16>, vector<8x8xf32> -> vector<8x8xf32>
    %cst_12 = arith.constant dense<0xFF800000> : vector<8xf32>
    %35 = vector.multi_reduction <maximumf>, %34, %cst_12 [1] : vector<8x8xf32> to vector<8xf32>
    %36 = vector.shape_cast %35 : vector<8xf32> to vector<8x1xf32>
    %37 = vector.broadcast %36 : vector<8x1xf32> to vector<8x8xf32>
    %38 = arith.subf %34, %37 : vector<8x8xf32>
    %39 = math.exp %38 : vector<8x8xf32>
    %cst_13 = arith.constant dense<0.000000e+00> : vector<8xf32>
    %40 = vector.multi_reduction <add>, %39, %cst_13 [1] : vector<8x8xf32> to vector<8xf32>
    %41 = vector.shape_cast %40 : vector<8xf32> to vector<8x1xf32>
    %42 = tpu.reciprocal %41 {approx = true} : vector<8x1xf32> -> vector<8x1xf32>
    %43 = vector.broadcast %42 : vector<8x1xf32> to vector<8x8xf32>
    %44 = arith.mulf %39, %43 : vector<8x8xf32>
    %45 = arith.truncf %44 : vector<8x8xf32> to vector<8x8xbf16>
    %46 = arith.truncf %31 : vector<8x32xf32> to vector<8x32xbf16>
    %cst_14 = arith.constant dense<0.000000e+00> : vector<8x32xf32>
    %47 = tpu.matmul %45, %46, %cst_14 {dimension_numbers = #tpu.dot_dimension_numbers<[1], [0], [0], [1], [0, 0, 1, 1], [], []>} : vector<8x8xbf16>, vector<8x32xbf16>, vector<8x32xf32> -> vector<8x32xf32>
    %c1 = arith.constant 1 : index
    %c0_15 = arith.constant 0 : index
    %c0_16 = arith.constant 0 : index
    %48 = vector.load %arg3[%c1, %c0_15, %c0_16] : memref<2x8x32xf32, #tpu.memory_space<vmem>>, vector<1x8x32xf32>
    %49 = vector.shape_cast %48 : vector<1x8x32xf32> to vector<8x32xf32>
    %50 = vector.shape_cast %47 : vector<8x32xf32> to vector<1x8x32xf32>
    tpu.vector_store %arg3[%c1, %c0_15, %c0_16], %50 {strides = array<i32>} : memref<2x8x32xf32, #tpu.memory_space<vmem>>, vector<1x8x32xf32>,
    return
  }
  func.func @transform_0(%arg0: i32) -> (i32, i32, i32) {
    %c0_i32 = arith.constant 0 : i32
    %c0_i32_0 = arith.constant 0 : i32
    %c0_i32_1 = arith.constant 0 : i32
    return %arg0, %c0_i32, %c0_i32_0 : i32, i32, i32
  }
  func.func @transform_1(%arg0: i32) -> (i32, i32) {
    %c0_i32 = arith.constant 0 : i32
    %c0_i32_0 = arith.constant 0 : i32
    %c0_i32_1 = arith.constant 0 : i32
    return %c0_i32, %c0_i32_0 : i32, i32
  }
  func.func @transform_2(%arg0: i32) -> (i32, i32, i32) {
    %c0_i32 = arith.constant 0 : i32
    %c0_i32_0 = arith.constant 0 : i32
    %c0_i32_1 = arith.constant 0 : i32
    return %arg0, %c0_i32, %c0_i32_0 : i32, i32, i32
  }
}

</mosaic_0001>

<llo_original>
// kernel: tpu_custom_call.1
$region0: #{tpu_custom_call.1}
  #allocation0 [shape = 'u32[]', space=smem, size = 0x4, offset = 0x4, fixed_abs, tag = 'smem constant byte address 0x4 - core index']
  #allocation1 [shape = 'u32[144,128]{1,0:T(1,128)}', space=vmem, size = 0x12000, scoped, tag = 'internal scratch']
  %s0 = inlined_call_operand.hbm [shape: f32[4,8,32], index: 0, kind: input, shape index: {}]
  %s1 = inlined_call_operand.hbm [shape: bf16[32,96], index: 1, kind: input, shape index: {}]
  %s2 = inlined_call_operand.hbm [shape: f32[4,8,32], index: 2, kind: output, shape index: {}]
  %s3 = sld [smem:[#allocation0]]
  $region49: #{tpu_custom_call.1} parent=0
    _
  %s5 = ssub.s32 1, %s3
  %s6 = scalar_select 0, %s5, %s3
  $region1: #{tpu_custom_call.1} parent=0
    #allocation2 [shape = 'u8[16384]{0}', space=vmem, size = 0x4000, scoped, tag = 'input window, operand 0']
    #allocation3 [shape = 's32[2]{0}', space=sflag, size = 0x8, scoped, tag = 'scoped memory for tpu_custom_call.1']
    #allocation4 [shape = 's32[2]{0}', space=sflag, size = 0x8, scoped, tag = 'scoped memory for tpu_custom_call.1']
    #allocation5 [shape = 'u8[8192]{0}', space=vmem, size = 0x2000, scoped, tag = 'input window, operand 1, single buffered']
    #allocation6 [shape = 's32[1]{0}', space=sflag, size = 0x4, scoped, tag = 'scoped memory for tpu_custom_call.1']
    #allocation7 [shape = 'u8[16384]{0}', space=vmem, size = 0x4000, scoped, tag = 'output window, operand 0']
    %7 = vsyncpa [#allocation3], 0
    %s8 = scalar_lea.sflag [#allocation3], 1
    %9 = vsyncpa %s8, 0
    %10 = vsyncpa [#allocation6], 0
    %11 = vsyncpa [#allocation4], 0
    %s12 = scalar_lea.sflag [#allocation4], 1
    %13 = vsyncpa %s12, 0
    loop: start=0, step=1, limit=4
    $region2: #{tpu_custom_call.1} parent=1 // loop_pre_header
      _
    $region3: #{tpu_custom_call.1} parent=1 // loop_header
      %s15 = sphi 0, %s19
      %p16 = scmp.ge.s32.totalorder %s15, 4
      %s25 = sphi 0, %s27
      %s28 = sphi 0, %s25
      %s29 = sphi 0, %s28
      %s45 = sphi 0, %s29
      %s49 = sphi 0, %s49
      %s51 = sphi 0, %s49
      %s52 = sphi 0, %s51
      %s66 = sphi 0, %s52
      %s72 = sphi 0, %s74
      %s75 = sphi 0, %s72
      %s76 = sphi 0, %s75
      %s92 = sphi 0, %s76
    $region4: #{tpu_custom_call.1} parent=1 // loop_header_branch
      %18 = sbr.rel (%p16) target = $region8
    $region5: #{tpu_custom_call.1} parent=1 // loop_body
      %s20 = ssub.s32 %s15, 1
      %s21 = ssub.s32 %s15, 2
      %s22 = sadd.s32 %s15, 1
      %s23 = ssub.s32 %s15, %s22
      %p24 = scmp.eq.s32.totalorder %s23, 0
      %s26 = sadd.s32 %s25, 1
      %s27 = scalar_select %p24, %s25, %s26
      %p30 = pneg %p24
      %p31 = scmp.eq.s32.totalorder %s15, 1
      %p32 = por %p30, %p31
      %p33 = scmp.ne.s32.totalorder %s25, %s28
      %p34 = scmp.eq.s32.totalorder %s15, 0
      %p35 = por %p33, %p34
      %p36 = scmp.ne.s32.totalorder %s25, %s28
      %p37 = scmp.eq.s32.totalorder %s20, 1
      %p38 = por %p36, %p37
      %p39 = scmp.ne.s32.totalorder %s28, %s29
      %p40 = scmp.eq.s32.totalorder %s20, 0
      %p41 = por %p39, %p40
      %p42 = scmp.ne.s32.totalorder %s28, %s29
      %p43 = scmp.eq.s32.totalorder %s21, 1
      %p44 = por %p42, %p43
      %p46 = scmp.ne.s32.totalorder %s29, %s45
      %p47 = scmp.eq.s32.totalorder %s21, 0
      %p48 = por %p46, %p47
      %s50 = sadd.s32 %s49, 1
      %p53 = scmp.eq.s32.totalorder %s15, 1
      %p54 = scmp.ne.s32.totalorder %s49, %s51
      %p55 = scmp.eq.s32.totalorder %s15, 0
      %p56 = por %p54, %p55
      %p57 = scmp.ne.s32.totalorder %s49, %s51
      %p58 = scmp.eq.s32.totalorder %s20, 1
      %p59 = por %p57, %p58
      %p60 = scmp.ne.s32.totalorder %s51, %s52
      %p61 = scmp.eq.s32.totalorder %s20, 0
      %p62 = por %p60, %p61
      %p63 = scmp.ne.s32.totalorder %s51, %s52
      %p64 = scmp.eq.s32.totalorder %s21, 1
      %p65 = por %p63, %p64
      %p67 = scmp.ne.s32.totalorder %s52, %s66
      %p68 = scmp.eq.s32.totalorder %s21, 0
      %p69 = por %p67, %p68
      %s70 = ssub.s32 %s15, %s22
      %p71 = scmp.eq.s32.totalorder %s70, 0
      %s73 = sadd.s32 %s72, 1
      %s74 = scalar_select %p71, %s72, %s73
      %p77 = pneg %p71
      %p78 = scmp.eq.s32.totalorder %s15, 1
      %p79 = por %p77, %p78
      %p80 = scmp.ne.s32.totalorder %s72, %s75
      %p81 = scmp.eq.s32.totalorder %s15, 0
      %p82 = por %p80, %p81
      %p83 = scmp.ne.s32.totalorder %s72, %s75
      %p84 = scmp.eq.s32.totalorder %s20, 1
      %p85 = por %p83, %p84
      %p86 = scmp.ne.s32.totalorder %s75, %s76
      %p87 = scmp.eq.s32.totalorder %s20, 0
      %p88 = por %p86, %p87
      %p89 = scmp.ne.s32.totalorder %s75, %s76
      %p90 = scmp.eq.s32.totalorder %s21, 1
      %p91 = por %p89, %p90
      %p93 = scmp.ne.s32.totalorder %s76, %s92
      %p94 = scmp.eq.s32.totalorder %s21, 0
      %p95 = por %p93, %p94
      %p96 = scmp.le.s32.totalorder 1, %s15
      %p97 = scmp.lt.s32.totalorder %s15, 3
      %p98 = pnand %p96, %p97
      %p99 = pneg %p98
      // Predicated region
      $region9: #{tpu_custom_call.1} parent=5 // pred_check
        _
      $region10: #{tpu_custom_call.1} parent=5 // pred_check_branch
        %101 = sbr.rel (%p98) target = $region12
      $region11: #{tpu_custom_call.1} parent=5 // pred_region
        %s102 = ssub.s32 %s15, 1
        // Predicated region
        $region13: #{tpu_custom_call.1} parent=11 // pred_check
          %p103 = pneg %p62
        $region14: #{tpu_custom_call.1} parent=11 // pred_check_branch
          %105 = sbr.rel (%p103) target = $region16
        $region15: #{tpu_custom_call.1} parent=11 // pred_region
          %s107 = ssub.s32 256, 256
          %108 = vsyncadd [#allocation6], %s107
          %s109 = sshll.u32 [#allocation5], 4
          %s110 = int_to_ptr.vmem [resolvable:$true] %s109
          %115 = dma.hbm_to_vmem [thread:$0]  %s1, 256, %s110, [#allocation6], 64, 64, 4
        $region16: #{tpu_custom_call.1} parent=11 // pred_fallthru
          _
      $region12: #{tpu_custom_call.1} parent=5 // pred_fallthru
        _
      %p116 = scmp.lt.s32.totalorder %s15, 2
      // Predicated region
      $region17: #{tpu_custom_call.1} parent=5 // pred_check
        %p117 = pneg %p116
      $region18: #{tpu_custom_call.1} parent=5 // pred_check_branch
        %119 = sbr.rel (%p117) target = $region20
      $region19: #{tpu_custom_call.1} parent=5 // pred_region
        // Predicated region
        $region21: #{tpu_custom_call.1} parent=19 // pred_check
          %p120 = pneg %p35
        $region22: #{tpu_custom_call.1} parent=19 // pred_check_branch
          %122 = sbr.rel (%p120) target = $region24
        $region23: #{tpu_custom_call.1} parent=19 // pred_region
          %s123 = sand.u32 %s25, 1
          %s124 = scalar_lea.sflag [#allocation3], %s123
          %s125 = sand.u32 %s25, 1
          %s126 = smul.addr %s125, 16
          %s127 = scalar_lea.vmem [#allocation2], %s126
          %s128 = smul.u32 2, %s15
          %s130 = ssub.s32 256, 256
          %131 = vsyncadd %s124, %s130
          %s132 = smul.addr %s128, 128
          %s133 = scalar_lea.hbm %s0, %s132
          %s134 = sshll.u32 %s127, 4
          %s135 = int_to_ptr.vmem [resolvable:$true] %s134
          %140 = dma.hbm_to_vmem [thread:$0]  %s133, 256, %s135, %s124, 128, 128, 8
        $region24: #{tpu_custom_call.1} parent=19 // pred_fallthru
          _
      $region20: #{tpu_custom_call.1} parent=5 // pred_fallthru
        _
      %p141 = scmp.le.s32.totalorder 1, %s15
      %p142 = scmp.lt.s32.totalorder %s15, 3
      %p143 = pnand %p141, %p142
      %p144 = pneg %p143
      // Predicated region
      $region25: #{tpu_custom_call.1} parent=5 // pred_check
        _
      $region26: #{tpu_custom_call.1} parent=5 // pred_check_branch
        %146 = sbr.rel (%p143) target = $region28
      $region27: #{tpu_custom_call.1} parent=5 // pred_region
        %s147 = ssub.s32 %s15, 1
        %s148 = sand.u32 %s28, 1
        %s149 = scalar_lea.sflag [#allocation3], %s148
        %s150 = sand.u32 %s28, 1
        %s151 = smul.addr %s150, 16
        %s152 = scalar_lea.vmem [#allocation2], %s151
        // Predicated region
        $region29: #{tpu_custom_call.1} parent=27 // pred_check
          %p153 = pneg %p41
        $region30: #{tpu_custom_call.1} parent=27 // pred_check_branch
          %155 = sbr.rel (%p153) target = $region32
        $region31: #{tpu_custom_call.1} parent=27 // pred_region
          %156 = dma.done %s149, 256
        $region32: #{tpu_custom_call.1} parent=27 // pred_fallthru
          _
        // Predicated region
        $region33: #{tpu_custom_call.1} parent=27 // pred_check
          %p157 = pneg %p62
        $region34: #{tpu_custom_call.1} parent=27 // pred_check_branch
          %159 = sbr.rel (%p157) target = $region36
        $region35: #{tpu_custom_call.1} parent=27 // pred_region
          %160 = dma.done [#allocation6], 256
        $region36: #{tpu_custom_call.1} parent=27 // pred_fallthru
          _
        %s161 = sand.u32 %s28, 1
        %s162 = scalar_lea.sflag [#allocation3], %s161
        %s163 = sand.u32 %s28, 1
        %s164 = smul.addr %s163, 16
        %s165 = scalar_lea.vmem [#allocation2], %s164
        %p166 = pneg %p41
        %p167 = pneg %p38
        %p168 = pneg %p62
        %p169 = pneg %p59
        %p170 = pneg %p88
        %p171 = pneg %p85
        %s172 = sand.u32 %s75, 1
        %s173 = scalar_lea.sflag [#allocation4], %s172
        %s174 = sand.u32 %s75, 1
        %s175 = smul.addr %s174, 16
        %s176 = scalar_lea.vmem [#allocation7], %s175
        %s177 = smul.u32 2, %s20
        %s178 = smul.u32 2, %s20
        %v180 = vld [vmem:[%s152] sm:$0xff]
        %v181 = vld [vmem:[%s152 + $0x8] sm:$0xff]
        %v182 = vpack.c.bf16 %v180, %v180
        %v183 = vpack.c.bf16 %v181, %v181
        %v184 = vld [vmem:[#allocation5] sm:$0xf]
        %v185 = vld [vmem:[#allocation5 + $0x4] sm:$0xf]
        %v186 = vld [vmem:[#allocation5 + $0x8] sm:$0xf]
        %v187 = vld [vmem:[#allocation5 + $0xc] sm:$0xf]
        %v190 = vunpack.c.l.b16 %v182
        %v191 = vunpack.c.l.b16 %v183
        %v192 = vpack.c.b16 %v191, %v190
        %v197 = vunpack.c.l.b16 %v184
        %v198 = vunpack.c.l.b16 %v185
        %v199 = vunpack.c.l.b16 %v186
        %v200 = vunpack.c.l.b16 %v187
        %v201 = vpack.c.b16 %v198, %v197
        %v202 = vpack.c.b16 %v200, %v199
        %vm205 = vcmask 261120
        %v207 = vsel %vm205, %v192, 0
        %209 = vmatprep.subr.bf16.mxu0 0
        %210 = vmatpush1.bf16.msra.mxu0 0
        %211 = vmatprep.subr.bf16.mxu0 0
        %212 = vmatpush1.bf16.msra.mxu0 0
        %213 = vmatprep.subr.bf16.mxu0 0
        %214 = vmatpush1.bf16.msra.mxu0 0
        %215 = vmatprep.subr.bf16.mxu0 0
        %216 = vmatpush1.bf16.msra.mxu0 0
        %217 = vmatprep.subr.bf16.mxu0 0
        %218 = vmatpush1.bf16.msra.mxu0 0
        %219 = vmatprep.subr.bf16.mxu0 0
        %220 = vmatpush1.bf16.msra.mxu0 0
        %221 = vmatprep.subr.bf16.mxu0 0
        %222 = vmatpush1.bf16.msra.mxu0 %v202
        %223 = vmatprep.subr.bf16.mxu0 0
        %224 = vmatpush1.bf16.msra.mxu0 %v201
        %225 = vmatprep.subr.bf16.mxu0 0
        %226 = vmatpush2.bf16.msra.mxu0 0
        %227 = vmatprep.subr.bf16.mxu0 0
        %228 = vmatpush2.bf16.msra.mxu0 0
        %229 = vmatprep.subr.bf16.mxu0 0
        %230 = vmatpush2.bf16.msra.mxu0 0
        %231 = vmatprep.subr.bf16.mxu0 0
        %232 = vmatpush2.bf16.msra.mxu0 0
        %233 = vmatprep.subr.bf16.mxu0 0
        %234 = vmatpush2.bf16.msra.mxu0 0
        %235 = vmatprep.subr.bf16.mxu0 0
        %236 = vmatpush2.bf16.msra.mxu0 0
        %237 = vmatprep.subr.bf16.mxu0 0
        %238 = vmatpush2.bf16.msra.mxu0 0
        %239 = vmatprep.subr.bf16.mxu0 0
        %240 = vmatpush2.bf16.msra.mxu0 0
        %241 = vmatprep.mubr.bf16.mxu0 0
        %242 = vmatmul.mubr.bf16.gmra.mxu0 %v207
        %v243 = vpop.f32.mrf.mxu0
        %v244 = vadd.f32 0.0, %v243
        %v245 = vpop.f32.mrf.mxu0
        %v246 = vpop.f32.mrf.mxu0
        %v247 = vadd.f32 0.0, %v246
        %v248 = vpop.f32.mrf.mxu0
        %249 = vdwg.mxu0
        %v250 = vpack.c.bf16 %v244, %v244
        %252 = vrot.lane.b32.xlu0 %v250, 96
        %v253 = vpop.permute.xlu0 %252
        %v255 = vsel %vm205, %v250, 0
        %v258 = vsel %vm205, %v253, 0
        %260 = vmatprep.subr.bf16.mxu0 0
        %261 = vmatpush1.bf16.xpose.msra.mxu0 0
        %262 = vmatprep.subr.bf16.mxu0 0
        %263 = vmatpush1.bf16.xpose.msra.mxu0 0
        %264 = vmatprep.subr.bf16.mxu0 0
        %265 = vmatpush1.bf16.xpose.msra.mxu0 0
        %266 = vmatprep.subr.bf16.mxu0 0
        %267 = vmatpush1.bf16.xpose.msra.mxu0 0
        %268 = vmatprep.subr.bf16.mxu0 0
        %269 = vmatpush1.bf16.xpose.msra.mxu0 0
        %270 = vmatprep.subr.bf16.mxu0 0
        %271 = vmatpush1.bf16.xpose.msra.mxu0 0
        %272 = vmatprep.subr.bf16.mxu0 0
        %273 = vmatpush1.bf16.xpose.msra.mxu0 0
        %274 = vmatprep.subr.bf16.mxu0 0
        %275 = vmatpush1.bf16.xpose.msra.mxu0 %v258
        %276 = vmatprep.subr.bf16.mxu0 0
        %277 = vmatpush2.bf16.xpose.msra.mxu0 0
        %278 = vmatprep.subr.bf16.mxu0 0
        %279 = vmatpush2.bf16.xpose.msra.mxu0 0
        %280 = vmatprep.subr.bf16.mxu0 0
        %281 = vmatpush2.bf16.xpose.msra.mxu0 0
        %282 = vmatprep.subr.bf16.mxu0 0
        %283 = vmatpush2.bf16.xpose.msra.mxu0 0
        %284 = vmatprep.subr.bf16.mxu0 0
        %285 = vmatpush2.bf16.xpose.msra.mxu0 0
        %286 = vmatprep.subr.bf16.mxu0 0
        %287 = vmatpush2.bf16.xpose.msra.mxu0 0
        %288 = vmatprep.subr.bf16.mxu0 0
        %289 = vmatpush2.bf16.xpose.msra.mxu0 0
        %290 = vmatprep.subr.bf16.mxu0 0
        %291 = vmatpush2.bf16.xpose.msra.mxu0 0
        %292 = vmatprep.mubr.bf16.mxu0 0
        %293 = vmatmul.mubr.bf16.gmra.mxu0 %v255
        %v294 = vpop.f32.mrf.mxu0
        %v295 = vadd.f32 0.0, %v294
        %v296 = vpop.f32.mrf.mxu0
        %v297 = vpop.f32.mrf.mxu0
        %v298 = vpop.f32.mrf.mxu0
        %299 = vdwg.mxu0
        %vm300 = vcmask 64512
        %v301 = vsel %vm300, %v295, -inf
        %302 = vmax.xlane.f32.xlu0 %v301
        %v303 = vpop.xlane.xlu0 %302
        %v304 = vsub.f32 %v295, %v303
        %v305 = vmul.f32 %v304, 1.442695
        %v306 = vpow.pop %v305
        %v307 = vsel %vm300, %v306, 0.0
        %308 = vadd.xlane.f32.xlu0 %v307
        %v309 = vpop.xlane.xlu0 %308
        %v310 = vrcp.pop %v309
        %v311 = vmul.f32 %v306, %v310
        %v312 = vpack.c.bf16 %v311, %v311
        %313 = vrot.lane.b32.xlu0 %v250, 64
        %v314 = vpop.permute.xlu0 %313
        %v316 = vsel %vm300, %v312, 0
        %vm318 = vcmask 1043456
        %v320 = vsel %vm318, %v314, 0
        %322 = vmatprep.subr.bf16.mxu0 0
        %323 = vmatpush1.bf16.msra.mxu0 0
        %324 = vmatprep.subr.bf16.mxu0 0
        %325 = vmatpush1.bf16.msra.mxu0 0
        %326 = vmatprep.subr.bf16.mxu0 0
        %327 = vmatpush1.bf16.msra.mxu0 0
        %328 = vmatprep.subr.bf16.mxu0 0
        %329 = vmatpush1.bf16.msra.mxu0 0
        %330 = vmatprep.subr.bf16.mxu0 0
        %331 = vmatpush1.bf16.msra.mxu0 0
        %332 = vmatprep.subr.bf16.mxu0 0
        %333 = vmatpush1.bf16.msra.mxu0 0
        %334 = vmatprep.subr.bf16.mxu0 0
        %335 = vmatpush1.bf16.msra.mxu0 0
        %336 = vmatprep.subr.bf16.mxu0 0
        %337 = vmatpush1.bf16.msra.mxu0 %v320
        %338 = vmatprep.subr.bf16.mxu0 0
        %339 = vmatpush2.bf16.msra.mxu0 0
        %340 = vmatprep.subr.bf16.mxu0 0
        %341 = vmatpush2.bf16.msra.mxu0 0
        %342 = vmatprep.subr.bf16.mxu0 0
        %343 = vmatpush2.bf16.msra.mxu0 0
        %344 = vmatprep.subr.bf16.mxu0 0
        %345 = vmatpush2.bf16.msra.mxu0 0
        %346 = vmatprep.subr.bf16.mxu0 0
        %347 = vmatpush2.bf16.msra.mxu0 0
        %348 = vmatprep.subr.bf16.mxu0 0
        %349 = vmatpush2.bf16.msra.mxu0 0
        %350 = vmatprep.subr.bf16.mxu0 0
        %351 = vmatpush2.bf16.msra.mxu0 0
        %352 = vmatprep.subr.bf16.mxu0 0
        %353 = vmatpush2.bf16.msra.mxu0 0
        %354 = vmatprep.mubr.bf16.mxu0 0
        %355 = vmatmul.mubr.bf16.gmra.mxu0 %v316
        %v356 = vpop.f32.mrf.mxu0
        %v357 = vadd.f32 0.0, %v356
        %v358 = vpop.f32.mrf.mxu0
        %v359 = vpop.f32.mrf.mxu0
        %v360 = vpop.f32.mrf.mxu0
        %361 = vdwg.mxu0
        %362 = vst.msk [vmem:[%s176] sm:$0xff] %vm205, %v357
        %v363 = vpack.c.bf16 %v247, %v247
        %365 = vrot.lane.b32.xlu0 %v363, 96
        %v366 = vpop.permute.xlu0 %365
        %v368 = vsel %vm205, %v363, 0
        %v371 = vsel %vm205, %v366, 0
        %373 = vmatprep.subr.bf16.mxu0 0
        %374 = vmatpush1.bf16.xpose.msra.mxu0 0
        %375 = vmatprep.subr.bf16.mxu0 0
        %376 = vmatpush1.bf16.xpose.msra.mxu0 0
        %377 = vmatprep.subr.bf16.mxu0 0
        %378 = vmatpush1.bf16.xpose.msra.mxu0 0
        %379 = vmatprep.subr.bf16.mxu0 0
        %380 = vmatpush1.bf16.xpose.msra.mxu0 0
        %381 = vmatprep.subr.bf16.mxu0 0
        %382 = vmatpush1.bf16.xpose.msra.mxu0 0
        %383 = vmatprep.subr.bf16.mxu0 0
        %384 = vmatpush1.bf16.xpose.msra.mxu0 0
        %385 = vmatprep.subr.bf16.mxu0 0
        %386 = vmatpush1.bf16.xpose.msra.mxu0 0
        %387 = vmatprep.subr.bf16.mxu0 0
        %388 = vmatpush1.bf16.xpose.msra.mxu0 %v371
        %389 = vmatprep.subr.bf16.mxu0 0
        %390 = vmatpush2.bf16.xpose.msra.mxu0 0
        %391 = vmatprep.subr.bf16.mxu0 0
        %392 = vmatpush2.bf16.xpose.msra.mxu0 0
        %393 = vmatprep.subr.bf16.mxu0 0
        %394 = vmatpush2.bf16.xpose.msra.mxu0 0
        %395 = vmatprep.subr.bf16.mxu0 0
        %396 = vmatpush2.bf16.xpose.msra.mxu0 0
        %397 = vmatprep.subr.bf16.mxu0 0
        %398 = vmatpush2.bf16.xpose.msra.mxu0 0
        %399 = vmatprep.subr.bf16.mxu0 0
        %400 = vmatpush2.bf16.xpose.msra.mxu0 0
        %401 = vmatprep.subr.bf16.mxu0 0
        %402 = vmatpush2.bf16.xpose.msra.mxu0 0
        %403 = vmatprep.subr.bf16.mxu0 0
        %404 = vmatpush2.bf16.xpose.msra.mxu0 0
        %405 = vmatprep.mubr.bf16.mxu0 0
        %406 = vmatmul.mubr.bf16.gmra.mxu0 %v368
        %v407 = vpop.f32.mrf.mxu0
        %v408 = vadd.f32 0.0, %v407
        %v409 = vpop.f32.mrf.mxu0
        %v410 = vpop.f32.mrf.mxu0
        %v411 = vpop.f32.mrf.mxu0
        %412 = vdwg.mxu0
        %v413 = vsel %vm300, %v408, -inf
        %414 = vmax.xlane.f32.xlu0 %v413
        %v415 = vpop.xlane.xlu0 %414
        %v416 = vsub.f32 %v408, %v415
        %v417 = vmul.f32 %v416, 1.442695
        %v418 = vpow.pop %v417
        %v419 = vsel %vm300, %v418, 0.0
        %420 = vadd.xlane.f32.xlu0 %v419
        %v421 = vpop.xlane.xlu0 %420
        %v422 = vrcp.pop %v421
        %v423 = vmul.f32 %v418, %v422
        %v424 = vpack.c.bf16 %v423, %v423
        %425 = vrot.lane.b32.xlu0 %v363, 64
        %v426 = vpop.permute.xlu0 %425
        %v428 = vsel %vm300, %v424, 0
        %v431 = vsel %vm318, %v426, 0
        %433 = vmatprep.subr.bf16.mxu0 0
        %434 = vmatpush1.bf16.msra.mxu0 0
        %435 = vmatprep.subr.bf16.mxu0 0
        %436 = vmatpush1.bf16.msra.mxu0 0
        %437 = vmatprep.subr.bf16.mxu0 0
        %438 = vmatpush1.bf16.msra.mxu0 0
        %439 = vmatprep.subr.bf16.mxu0 0
        %440 = vmatpush1.bf16.msra.mxu0 0
        %441 = vmatprep.subr.bf16.mxu0 0
        %442 = vmatpush1.bf16.msra.mxu0 0
        %443 = vmatprep.subr.bf16.mxu0 0
        %444 = vmatpush1.bf16.msra.mxu0 0
        %445 = vmatprep.subr.bf16.mxu0 0
        %446 = vmatpush1.bf16.msra.mxu0 0
        %447 = vmatprep.subr.bf16.mxu0 0
        %448 = vmatpush1.bf16.msra.mxu0 %v431
        %449 = vmatprep.subr.bf16.mxu0 0
        %450 = vmatpush2.bf16.msra.mxu0 0
        %451 = vmatprep.subr.bf16.mxu0 0
        %452 = vmatpush2.bf16.msra.mxu0 0
        %453 = vmatprep.subr.bf16.mxu0 0
        %454 = vmatpush2.bf16.msra.mxu0 0
        %455 = vmatprep.subr.bf16.mxu0 0
        %456 = vmatpush2.bf16.msra.mxu0 0
        %457 = vmatprep.subr.bf16.mxu0 0
        %458 = vmatpush2.bf16.msra.mxu0 0
        %459 = vmatprep.subr.bf16.mxu0 0
        %460 = vmatpush2.bf16.msra.mxu0 0
        %461 = vmatprep.subr.bf16.mxu0 0
        %462 = vmatpush2.bf16.msra.mxu0 0
        %463 = vmatprep.subr.bf16.mxu0 0
        %464 = vmatpush2.bf16.msra.mxu0 0
        %465 = vmatprep.mubr.bf16.mxu0 0
        %466 = vmatmul.mubr.bf16.gmra.mxu0 %v428
        %v467 = vpop.f32.mrf.mxu0
        %v468 = vadd.f32 0.0, %v467
        %v469 = vpop.f32.mrf.mxu0
        %v470 = vpop.f32.mrf.mxu0
        %v471 = vpop.f32.mrf.mxu0
        %472 = vdwg.mxu0
        %s473 = scalar_lea.vmem %s176, 8 [#allocation7]
        %474 = vst.msk [vmem:[%s473] sm:$0xff] %vm205, %v468
        %s475 = sand.u32 %s75, 1
        %s476 = scalar_lea.sflag [#allocation4], %s475
        %s477 = sand.u32 %s75, 1
        %s478 = smul.addr %s477, 16
        %s479 = scalar_lea.vmem [#allocation7], %s478
        // Predicated region
        $region37: #{tpu_custom_call.1} parent=27 // pred_check
          %p480 = pneg %p85
        $region38: #{tpu_custom_call.1} parent=27 // pred_check_branch
          %482 = sbr.rel (%p480) target = $region40
        $region39: #{tpu_custom_call.1} parent=27 // pred_region
          %s483 = smul.u32 2, %s20
          %s485 = ssub.s32 256, 256
          %486 = vsyncadd %s476, %s485
          %s487 = smul.addr %s483, 128
          %s488 = scalar_lea.hbm %s2, %s487
          %s489 = sshll.u32 %s479, 4
          %s490 = int_to_ptr.vmem [resolvable:$true] %s489
          %495 = dma.vmem_to_hbm [thread:$0]  %s490, 256, %s488, %s476, 128, 128, 8
        $region40: #{tpu_custom_call.1} parent=27 // pred_fallthru
          _
      $region28: #{tpu_custom_call.1} parent=5 // pred_fallthru
        _
      %p496 = scmp.le.s32.totalorder 2, %s15
      // Predicated region
      $region41: #{tpu_custom_call.1} parent=5 // pred_check
        %p497 = pneg %p496
      $region42: #{tpu_custom_call.1} parent=5 // pred_check_branch
        %499 = sbr.rel (%p497) target = $region44
      $region43: #{tpu_custom_call.1} parent=5 // pred_region
        %s500 = ssub.s32 %s15, 2
        // Predicated region
        $region45: #{tpu_custom_call.1} parent=43 // pred_check
          %p501 = pneg %p91
        $region46: #{tpu_custom_call.1} parent=43 // pred_check_branch
          %503 = sbr.rel (%p501) target = $region48
        $region47: #{tpu_custom_call.1} parent=43 // pred_region
          %s504 = sand.u32 %s76, 1
          %s505 = scalar_lea.sflag [#allocation4], %s504
          %s506 = sand.u32 %s76, 1
          %s507 = smul.addr %s506, 16
          %s508 = scalar_lea.vmem [#allocation7], %s507
          %509 = dma.done %s505, 256
        $region48: #{tpu_custom_call.1} parent=43 // pred_fallthru
          _
      $region44: #{tpu_custom_call.1} parent=5 // pred_fallthru
        _
    $region6: #{tpu_custom_call.1} parent=1 // loop_footer
      %s19 = sadd.s32 1, %s15
    $region7: #{tpu_custom_call.1} parent=1 // loop_footer_branch
      %14 = sbr.rel target = $region3
    $region8: #{tpu_custom_call.1} parent=1 // loop_exit
      _
    %510 = vsyncpa [#allocation3], 1
    %s511 = scalar_lea.sflag [#allocation3], 1
    %512 = vsyncpa %s511, 1
    %513 = vsyncpa [#allocation6], 1
    %514 = vsyncpa [#allocation4], 1
    %s515 = scalar_lea.sflag [#allocation4], 1
    %516 = vsyncpa %s515, 1

</llo_original>
